<compile_context>
chip_gen: v7x
topology: tpu7x:2x2x1
jax: 0.10.0
libtpu: 0.0.40
codegen_flags: <defaults>
</compile_context>

<pallas_src>
import collections
import functools

import jax
import jax.numpy as jnp
from jax.experimental import pallas as pl
from jax.experimental.pallas import tpu as pltpu

# v7x has only 64 MiB VMEM per TensorCore; leave headroom for compiler scratch.
_VMEM_LIMIT_BYTES = 48 * 1024 * 1024

SharedMeta = collections.namedtuple("SharedMeta", "nf T Kp Tp tk tn cdt")
IndivMeta = collections.namedtuple("IndivMeta", "n_vars nf T Kp Tp tk tn v_tile cdt")


def _round_up(x, m):
    return ((x + m - 1) // m) * m


def _choose_lane_tile(T, max_tile):
    """Lane-dense output tiling: largest 128-multiple <= max_tile dividing Tp."""
    Tp = _round_up(T, 128)
    if Tp <= max_tile:
        return Tp, Tp
    tn = (max_tile // 128) * 128
    while Tp % tn:
        tn -= 128
    return tn, Tp


def _choose_k_tile(nf, max_tile):
    """Contraction tiling: full K if it fits, else a 256-multiple dividing nf."""
    if nf <= max_tile:
        return nf, nf
    tk = (max_tile // 256) * 256
    while tk >= 256:
        if nf % tk == 0:
            return tk, nf
        tk -= 256
    tk = (max_tile // 256) * 256          # no clean divisor: pad K (rare)
    return tk, _round_up(nf, tk)


def _choose_v_tile(n_vars, tk, tn, itemsize):
    """Variables per grid step.  The V axis is the *leading* block dim so it has
    no (8,128) constraint.  Keep double-buffered weight slabs under a budget
    and leave >=2 blocks along V so v7x megacore / pipelining kick in."""
    budget = 16 * 1024 * 1024
    per_var = 2 * tk * tn * itemsize      # double-buffered weight slab per var
    cap = max(1, budget // per_var)
    if n_vars >= 2:
        cap = min(cap, (n_vars + 1) // 2)
    for v in range(min(cap, n_vars), 0, -1):   # prefer a divisor (no V padding)
        if n_vars % v == 0:
            return v
    return 1


def _choose_m_tile(M, sub):
    """>=2 blocks along M when M > 256 (megacore / pipelining)."""
    if M <= 256:
        t = _round_up(M, sub)
        return t, t
    t = min(256, _round_up(-(-M // 2), sub))
    return t, _round_up(M, t)


# -----------------------------------------------------------------------------
# Kernels
# -----------------------------------------------------------------------------
def _shared_kernel_single_k(z_ref, w_ref, b_ref, o_ref):
    acc = jnp.dot(z_ref[...], w_ref[...], preferred_element_type=jnp.float32)
    o_ref[...] = (acc + b_ref[...]).astype(o_ref.dtype)


def _shared_kernel_multi_k(z_ref, w_ref, b_ref, o_ref, acc_ref):
    k = pl.program_id(2)

    @pl.when(k == 0)
    def _init():
        acc_ref[...] = jnp.zeros_like(acc_ref)

    acc_ref[...] += jnp.dot(z_ref[...], w_ref[...],
                            preferred_element_type=jnp.float32)

    @pl.when(k == pl.num_programs(2) - 1)
    def _finalize():
        o_ref[...] = (acc_ref[...] + b_ref[...]).astype(o_ref.dtype)


def _make_indiv_kernel(v_tile, multi_k):
    if not multi_k:
        def kernel(z_ref, w_ref, b_ref, o_ref):
            for v in range(v_tile):            # static unroll; ref-slice reads
                acc = jnp.dot(z_ref[v], w_ref[v],
                              preferred_element_type=jnp.float32)
                o_ref[v] = (acc + b_ref[v]).astype(o_ref.dtype)
        return kernel

    def kernel(z_ref, w_ref, b_ref, o_ref, acc_ref):
        k = pl.program_id(2)

        @pl.when(k == 0)
        def _init():
            acc_ref[...] = jnp.zeros_like(acc_ref)

        for v in range(v_tile):                # per-variable slice accumulate
            acc_ref[v] += jnp.dot(z_ref[v], w_ref[v],
                                  preferred_element_type=jnp.float32)

        @pl.when(k == pl.num_programs(2) - 1)
        def _finalize():
            for v in range(v_tile):
                o_ref[v] = (acc_ref[v] + b_ref[v]).astype(o_ref.dtype)

    return kernel


# -----------------------------------------------------------------------------
# One-time parameter preparation (padding / casting hoisted out of the step)
# -----------------------------------------------------------------------------
def prepare_params(weight, bias, *, individual, compute_dtype=jnp.bfloat16):
    """weight: [n_heads, nf, T]  (pre-transposed torch Linear weight, W.T)
       bias:   [n_heads, T]
       Returns (weight_padded, bias_padded_f32, meta)."""
    cdt = jnp.dtype(compute_dtype)
    n_heads, nf, T = weight.shape
    if individual:
        tn, Tp = _choose_lane_tile(T, max_tile=512)
        tk, Kp = _choose_k_tile(nf, max_tile=1024)
        v_tile = _choose_v_tile(n_heads, tk, tn, cdt.itemsize)
        w_p = jnp.pad(weight, ((0, 0), (0, Kp - nf), (0, Tp - T))).astype(cdt)
        b_p = jnp.pad(bias, ((0, 0), (0, Tp - T))).astype(jnp.float32)
        b_p = b_p.reshape(n_heads, 1, Tp)
        meta = IndivMeta(n_vars=n_heads, nf=nf, T=T, Kp=Kp, Tp=Tp, tk=tk, tn=tn,
                         v_tile=v_tile, cdt=cdt.name)
        return w_p, b_p, meta

    tn, Tp = _choose_lane_tile(T, max_tile=512)
    tk, Kp = _choose_k_tile(nf, max_tile=2048)
    w_p = jnp.pad(weight[0], ((0, Kp - nf), (0, Tp - T))).astype(cdt)
    b_p = jnp.pad(bias[:1], ((0, 0), (0, Tp - T))).astype(jnp.float32)
    meta = SharedMeta(nf=nf, T=T, Kp=Kp, Tp=Tp, tk=tk, tn=tn, cdt=cdt.name)
    return w_p, b_p, meta


# -----------------------------------------------------------------------------
# Forward paths
# -----------------------------------------------------------------------------
def _shared_forward(x, w_p, b_p, meta):
    bs, n_vars, d_model, patch_num = x.shape
    nf = d_model * patch_num
    cdt = jnp.dtype(meta.cdt)
    out_dtype = x.dtype
    M = bs * n_vars

    z = x.reshape(M, nf).astype(cdt)           # free reshape, no transpose
    sub = 16 if cdt.itemsize == 2 else 8
    tm, Mp = _choose_m_tile(M, sub)
    if (Mp, meta.Kp) != (M, nf):               # only tiny activation padding
        z = jnp.pad(z, ((0, Mp - M), (0, meta.Kp - nf)))

    num_k = meta.Kp // meta.tk
    grid_m, grid_n = Mp // tm, meta.Tp // meta.tn

    if num_k == 1:
        grid = (grid_m, grid_n)
        in_specs = [
            pl.BlockSpec((tm, meta.Kp), lambda i, j: (i, 0)),
            pl.BlockSpec((meta.Kp, meta.tn), lambda i, j: (0, j)),
            pl.BlockSpec((1, meta.tn), lambda i, j: (0, j)),
        ]
        out_specs = pl.BlockSpec((tm, meta.tn), lambda i, j: (i, j))
        scratch = []
        kernel = _shared_kernel_single_k
        sem = ("parallel", "parallel")
    else:
        grid = (grid_m, grid_n, num_k)
        in_specs = [
            pl.BlockSpec((tm, meta.tk), lambda i, j, k: (i, k)),
            pl.BlockSpec((meta.tk, meta.tn), lambda i, j, k: (k, j)),
            pl.BlockSpec((1, meta.tn), lambda i, j, k: (0, j)),
        ]
        out_specs = pl.BlockSpec((tm, meta.tn), lambda i, j, k: (i, j))
        scratch = [pltpu.VMEM((tm, meta.tn), jnp.float32)]
        kernel = _shared_kernel_multi_k
        sem = ("parallel", "parallel", "arbitrary")

    out = pl.pallas_call(
        kernel,
        out_shape=jax.ShapeDtypeStruct((Mp, meta.Tp), out_dtype),
        grid_spec=pltpu.PrefetchScalarGridSpec(
            num_scalar_prefetch=0, grid=grid,
            in_specs=in_specs, out_specs=out_specs, scratch_shapes=scratch),
        compiler_params=pltpu.CompilerParams(
            dimension_semantics=sem, vmem_limit_bytes=_VMEM_LIMIT_BYTES),
    )(z, w_p, b_p)
    return out[:M, :meta.T].reshape(bs, n_vars, meta.T)


def _indiv_forward(x, w_p, b_p, meta):
    bs, n_vars, d_model, patch_num = x.shape
    nf = d_model * patch_num
    cdt = jnp.dtype(meta.cdt)
    out_dtype = x.dtype

    # Variable axis leading: per-variable slices become free leading-axis views.
    z = jnp.transpose(x.reshape(bs, n_vars, nf), (1, 0, 2)).astype(cdt)
    if meta.Kp != nf:
        z = jnp.pad(z, ((0, 0), (0, 0), (0, meta.Kp - nf)))

    v_tile = meta.v_tile
    num_k = meta.Kp // meta.tk
    grid_v, grid_n = n_vars // v_tile, meta.Tp // meta.tn
    kernel = _make_indiv_kernel(v_tile, num_k > 1)

    if num_k == 1:
        grid = (grid_v, grid_n)
        in_specs = [
            pl.BlockSpec((v_tile, bs, meta.Kp), lambda v, j: (v, 0, 0)),
            pl.BlockSpec((v_tile, meta.Kp, meta.tn), lambda v, j: (v, 0, j)),
            pl.BlockSpec((v_tile, 1, meta.tn), lambda v, j: (v, 0, j)),
        ]
        out_specs = pl.BlockSpec((v_tile, bs, meta.tn), lambda v, j: (v, 0, j))
        scratch = []
        sem = ("parallel", "parallel")
    else:
        grid = (grid_v, grid_n, num_k)
        in_specs = [
            pl.BlockSpec((v_tile, bs, meta.tk), lambda v, j, k: (v, 0, k)),
            pl.BlockSpec((v_tile, meta.tk, meta.tn), lambda v, j, k: (v, k, j)),
            pl.BlockSpec((v_tile, 1, meta.tn), lambda v, j, k: (v, 0, j)),
        ]
        out_specs = pl.BlockSpec((v_tile, bs, meta.tn), lambda v, j, k: (v, 0, j))
        scratch = [pltpu.VMEM((v_tile, bs, meta.tn), jnp.float32)]
        sem = ("parallel", "parallel", "arbitrary")

    out = pl.pallas_call(
        kernel,
        out_shape=jax.ShapeDtypeStruct((n_vars, bs, meta.Tp), out_dtype),
        grid_spec=pltpu.PrefetchScalarGridSpec(
            num_scalar_prefetch=0, grid=grid,
            in_specs=in_specs, out_specs=out_specs, scratch_shapes=scratch),
        compiler_params=pltpu.CompilerParams(
            dimension_semantics=sem, vmem_limit_bytes=_VMEM_LIMIT_BYTES),
    )(z, w_p, b_p)
    # tiny [n_vars, bs, T] -> [bs, n_vars, T] transpose outside the kernel
    return jnp.transpose(out[:, :, :meta.T], (1, 0, 2))


@functools.partial(jax.jit, static_argnames=("meta",))
def flatten_head(x, w_p, b_p, *, meta):
    """x: [bs, n_vars, d_model, patch_num]; (w_p, b_p, meta) from prepare_params."""
    if isinstance(meta, SharedMeta):
        return _shared_forward(x, w_p, b_p, meta)
    return _indiv_forward(x, w_p, b_p, meta)


# -----------------------------------------------------------------------------
# Init + pure-JAX reference + self-test
# -----------------------------------------------------------------------------
def _init_linear(key, nf, target_window, n_heads):
    """PyTorch-Linear-like init (uniform +/- 1/sqrt(nf)); weight pre-transposed."""
    kw, kb = jax.random.split(key)
    bound = 1.0 / (nf ** 0.5)
    w = jax.random.uniform(kw, (n_heads, nf, target_window), jnp.float32, -bound, bound)
    b = jax.random.uniform(kb, (n_heads, target_window), jnp.float32, -bound, bound)
    return w, b


def _reference(x, weight, bias, individual):
    bs, n_vars, d_model, patch_num = x.shape
    z = x.reshape(bs, n_vars, -1)
    hp = jax.lax.Precision.HIGHEST
    if individual:
        return jnp.einsum("bvn,vnt->bvt", z, weight, precision=hp) + bias[None, :, :]
    return jnp.einsum("bvn,nt->bvt", z, weight[0], precision=hp) + bias[0][None, None, :]


if __name__ == "__main__":
    key = jax.random.PRNGKey(0)
    kx, kp1, kp2 = jax.random.split(key, 3)

    bs, n_vars, d_model, patch_num = 2, 4, 32, 16
    nf = d_model * patch_num          # 512
    target_window = 96

    x = jax.random.normal(kx, (bs, n_vars, d_model, patch_num), jnp.float32)
    w_ind, b_ind = _init_linear(kp1, nf, target_window, n_vars)
    w_sh, b_sh = _init_linear(kp2, nf, target_window, 1)

    ref_ind = _reference(x, w_ind, b_ind, True)
    ref_sh = _reference(x, w_sh, b_sh, False)

    # --- bf16 streaming path (default; f32 accumulation + f32 bias) ----------
    wp, bp, meta = prepare_params(w_ind, b_ind, individual=True)
    y_ind_bf16 = flatten_head(x, wp, bp, meta=meta)
    wp, bp, meta = prepare_params(w_sh, b_sh, individual=False)
    y_sh_bf16 = flatten_head(x, wp, bp, meta=meta)

    # --- f32 path (bit-accuracy check of the kernel structure) ---------------
    wp, bp, meta = prepare_params(w_ind, b_ind, individual=True,
                                  compute_dtype=jnp.float32)
    y_ind_f32 = flatten_head(x, wp, bp, meta=meta)
    wp, bp, meta = prepare_params(w_sh, b_sh, individual=False,
                                  compute_dtype=jnp.float32)
    y_sh_f32 = flatten_head(x, wp, bp, meta=meta)

    jax.block_until_ready((y_ind_bf16, y_sh_bf16, y_ind_f32, y_sh_f32))

    assert y_ind_bf16.shape == (bs, n_vars, target_window)
    assert y_sh_bf16.shape == (bs, n_vars, target_window)
    assert jnp.allclose(y_ind_f32, ref_ind, atol=1e-4, rtol=1e-4)
    assert jnp.allclose(y_sh_f32, ref_sh, atol=1e-4, rtol=1e-4)
    assert jnp.allclose(y_ind_bf16, ref_ind, atol=3e-2, rtol=3e-2)
    assert jnp.allclose(y_sh_bf16, ref_sh, atol=3e-2, rtol=3e-2)

    print("KERNEL_OK")
</pallas_src>

<mosaic_0001>
module attributes {stable_mosaic.version = 11 : i64} {
  func.func @kernel(%arg0: i32, %arg1: i32, %arg2: memref<2x2x512xbf16, #tpu.memory_space<vmem>>, %arg3: memref<2x512x128xbf16, #tpu.memory_space<vmem>>, %arg4: memref<2x1x128xf32, #tpu.memory_space<vmem>>, %arg5: memref<2x2x128xf32, #tpu.memory_space<vmem>>) attributes {dimension_semantics = [#tpu.dimension_semantics<parallel>, #tpu.dimension_semantics<parallel>], iteration_bounds = array<i64: 2, 1>, scalar_prefetch = 0 : i64, scratch_operands = 0 : i64, tpu.core_type = #tpu.core_type<tc>, window_params = [{transform_indices = @transform_0, window_bounds = array<i64: 2, 2, 512>}, {transform_indices = @transform_1, window_bounds = array<i64: 2, 512, 128>}, {transform_indices = @transform_2, window_bounds = array<i64: 2, 1, 128>}, {transform_indices = @transform_3, window_bounds = array<i64: 2, 2, 128>}]} {
    %c0 = arith.constant 0 : index
    %c0_0 = arith.constant 0 : index
    %c0_1 = arith.constant 0 : index
    %0 = vector.load %arg2[%c0, %c0_0, %c0_1] : memref<2x2x512xbf16, #tpu.memory_space<vmem>>, vector<1x2x512xbf16>
    %1 = vector.shape_cast %0 : vector<1x2x512xbf16> to vector<2x512xbf16>
    %c0_2 = arith.constant 0 : index
    %c0_3 = arith.constant 0 : index
    %c0_4 = arith.constant 0 : index
    %2 = vector.load %arg3[%c0_2, %c0_3, %c0_4] : memref<2x512x128xbf16, #tpu.memory_space<vmem>>, vector<1x512x128xbf16>
    %3 = vector.shape_cast %2 : vector<1x512x128xbf16> to vector<512x128xbf16>
    %cst = arith.constant dense<0.000000e+00> : vector<2x128xf32>
    %4 = tpu.matmul %1, %3, %cst {dimension_numbers = #tpu.dot_dimension_numbers<[1], [0], [0], [1], [0, 0, 1, 1], [], []>} : vector<2x512xbf16>, vector<512x128xbf16>, vector<2x128xf32> -> vector<2x128xf32>
    %c0_5 = arith.constant 0 : index
    %c0_6 = arith.constant 0 : index
    %c0_7 = arith.constant 0 : index
    %5 = vector.load %arg4[%c0_5, %c0_6, %c0_7] : memref<2x1x128xf32, #tpu.memory_space<vmem>>, vector<1x1x128xf32>
    %6 = vector.shape_cast %5 : vector<1x1x128xf32> to vector<1x128xf32>
    %7 = vector.broadcast %6 : vector<1x128xf32> to vector<2x128xf32>
    %8 = arith.addf %4, %7 : vector<2x128xf32>
    %c0_8 = arith.constant 0 : index
    %c0_9 = arith.constant 0 : index
    %c0_10 = arith.constant 0 : index
    %9 = vector.load %arg5[%c0_8, %c0_9, %c0_10] : memref<2x2x128xf32, #tpu.memory_space<vmem>>, vector<1x2x128xf32>
    %10 = vector.shape_cast %9 : vector<1x2x128xf32> to vector<2x128xf32>
    %11 = vector.shape_cast %8 : vector<2x128xf32> to vector<1x2x128xf32>
    tpu.vector_store %arg5[%c0_8, %c0_9, %c0_10], %11 {strides = array<i32>} : memref<2x2x128xf32, #tpu.memory_space<vmem>>, vector<1x2x128xf32>,
    %c1 = arith.constant 1 : index
    %c0_11 = arith.constant 0 : index
    %c0_12 = arith.constant 0 : index
    %12 = vector.load %arg2[%c1, %c0_11, %c0_12] : memref<2x2x512xbf16, #tpu.memory_space<vmem>>, vector<1x2x512xbf16>
    %13 = vector.shape_cast %12 : vector<1x2x512xbf16> to vector<2x512xbf16>
    %c1_13 = arith.constant 1 : index
    %c0_14 = arith.constant 0 : index
    %c0_15 = arith.constant 0 : index
    %14 = vector.load %arg3[%c1_13, %c0_14, %c0_15] : memref<2x512x128xbf16, #tpu.memory_space<vmem>>, vector<1x512x128xbf16>
    %15 = vector.shape_cast %14 : vector<1x512x128xbf16> to vector<512x128xbf16>
    %cst_16 = arith.constant dense<0.000000e+00> : vector<2x128xf32>
    %16 = tpu.matmul %13, %15, %cst_16 {dimension_numbers = #tpu.dot_dimension_numbers<[1], [0], [0], [1], [0, 0, 1, 1], [], []>} : vector<2x512xbf16>, vector<512x128xbf16>, vector<2x128xf32> -> vector<2x128xf32>
    %c1_17 = arith.constant 1 : index
    %c0_18 = arith.constant 0 : index
    %c0_19 = arith.constant 0 : index
    %17 = vector.load %arg4[%c1_17, %c0_18, %c0_19] : memref<2x1x128xf32, #tpu.memory_space<vmem>>, vector<1x1x128xf32>
    %18 = vector.shape_cast %17 : vector<1x1x128xf32> to vector<1x128xf32>
    %19 = vector.broadcast %18 : vector<1x128xf32> to vector<2x128xf32>
    %20 = arith.addf %16, %19 : vector<2x128xf32>
    %c1_20 = arith.constant 1 : index
    %c0_21 = arith.constant 0 : index
    %c0_22 = arith.constant 0 : index
    %21 = vector.load %arg5[%c1_20, %c0_21, %c0_22] : memref<2x2x128xf32, #tpu.memory_space<vmem>>, vector<1x2x128xf32>
    %22 = vector.shape_cast %21 : vector<1x2x128xf32> to vector<2x128xf32>
    %23 = vector.shape_cast %20 : vector<2x128xf32> to vector<1x2x128xf32>
    tpu.vector_store %arg5[%c1_20, %c0_21, %c0_22], %23 {strides = array<i32>} : memref<2x2x128xf32, #tpu.memory_space<vmem>>, vector<1x2x128xf32>,
    return
  }
  func.func @transform_0(%arg0: i32, %arg1: i32) -> (i32, i32, i32) {
    %c0_i32 = arith.constant 0 : i32
    %c0_i32_0 = arith.constant 0 : i32
    %c0_i32_1 = arith.constant 0 : i32
    return %arg0, %c0_i32, %c0_i32_0 : i32, i32, i32
  }
  func.func @transform_1(%arg0: i32, %arg1: i32) -> (i32, i32, i32) {
    %c0_i32 = arith.constant 0 : i32
    %c0_i32_0 = arith.constant 0 : i32
    return %arg0, %c0_i32, %arg1 : i32, i32, i32
  }
  func.func @transform_2(%arg0: i32, %arg1: i32) -> (i32, i32, i32) {
    %c0_i32 = arith.constant 0 : i32
    %c0_i32_0 = arith.constant 0 : i32
    return %arg0, %c0_i32, %arg1 : i32, i32, i32
  }
  func.func @transform_3(%arg0: i32, %arg1: i32) -> (i32, i32, i32) {
    %c0_i32 = arith.constant 0 : i32
    %c0_i32_0 = arith.constant 0 : i32
    return %arg0, %c0_i32, %arg1 : i32, i32, i32
  }
}

</mosaic_0001>

<llo_original>
// kernel: flatten_head.1
$region0: #{flatten_head.1}
  #allocation0 [shape = 'u32[]', space=smem, size = 0x4, offset = 0x4, fixed_abs, tag = 'smem constant byte address 0x4 - core index']
  #allocation1 [shape = 'u32[144,128]{1,0:T(1,128)}', space=vmem, size = 0x12000, scoped, tag = 'internal scratch']
  %s0 = inlined_call_operand.vmem [shape: bf16[4,2,512], index: 0, kind: input, shape index: {}]
  %s1 = inlined_call_operand.hbm [shape: bf16[4,512,128], index: 1, kind: input, shape index: {}]
  %s2 = inlined_call_operand.vmem [shape: f32[4,1,128], index: 2, kind: input, shape index: {}]
  %s3 = inlined_call_operand.vmem [shape: f32[4,2,128], index: 3, kind: output, shape index: {}]
  %s4 = sld [smem:[#allocation0]]
  $region49: #{flatten_head.1} parent=0
    _
  %s6 = ssub.s32 1, %s4
  %s7 = scalar_select 0, %s6, %s4
  $region1: #{flatten_head.1} parent=0
    #allocation2 [shape = 'u8[524288]{0}', space=vmem, size = 0x80000, scoped, tag = 'input window, operand 1']
    #allocation3 [shape = 's32[2]{0}', space=sflag, size = 0x8, scoped, tag = 'scoped memory for flatten_head.1']
    %8 = vsyncpa [#allocation3], 0
    %s9 = scalar_lea.sflag [#allocation3], 1
    %10 = vsyncpa %s9, 0
    loop: start=0, step=1, limit=4
    $region2: #{flatten_head.1} parent=1 // loop_pre_header
      _
    $region3: #{flatten_head.1} parent=1 // loop_header
      %s12 = sphi 0, %s16
      %p13 = scmp.ge.s32.totalorder %s12, 4
      %s19 = sphi 0, %s31
      %s20 = sphi 0, %s27
      %s21 = sphi 0, %s19
      %s22 = sphi 0, %s20
      %s23 = sphi 0, %s21
      %s24 = sphi 0, %s22
      %s34 = sphi 0, %s36
      %s37 = sphi 0, %s34
      %s38 = sphi 0, %s37
      %s54 = sphi 0, %s38
      %s62 = sphi 0, %s64
      %s65 = sphi 0, %s62
      %s66 = sphi 0, %s65
      %s82 = sphi 0, %s66
      %s90 = sphi 0, %s92
      %s93 = sphi 0, %s90
      %s94 = sphi 0, %s93
      %s110 = sphi 0, %s94
      %s118 = sphi 0, %s120
      %s121 = sphi 0, %s118
      %s122 = sphi 0, %s121
      %s138 = sphi 0, %s122
    $region4: #{flatten_head.1} parent=1 // loop_header_branch
      %15 = sbr.rel (%p13) target = $region8
    $region5: #{flatten_head.1} parent=1 // loop_body
      %s17 = ssub.s32 %s12, 1
      %s18 = ssub.s32 %s12, 2
      %s25 = sadd.s32 1, %s20
      %p26 = scmp.ge.s32.totalorder %s25, 1
      %s27 = scalar_select %p26, 0, %s25
      %s28 = sadd.s32 1, %s19
      %s29 = scalar_select %p26, %s28, %s19
      %p30 = scmp.ge.s32.totalorder %s29, 2
      %s31 = scalar_select %p30, 0, %s29
      %s32 = ssub.s32 %s19, %s31
      %p33 = scmp.eq.s32.totalorder %s32, 0
      %s35 = sadd.s32 %s34, 1
      %s36 = scalar_select %p33, %s34, %s35
      %p39 = pneg %p33
      %p40 = scmp.eq.s32.totalorder %s12, 1
      %p41 = por %p39, %p40
      %p42 = scmp.ne.s32.totalorder %s34, %s37
      %p43 = scmp.eq.s32.totalorder %s12, 0
      %p44 = por %p42, %p43
      %p45 = scmp.ne.s32.totalorder %s34, %s37
      %p46 = scmp.eq.s32.totalorder %s17, 1
      %p47 = por %p45, %p46
      %p48 = scmp.ne.s32.totalorder %s37, %s38
      %p49 = scmp.eq.s32.totalorder %s17, 0
      %p50 = por %p48, %p49
      %p51 = scmp.ne.s32.totalorder %s37, %s38
      %p52 = scmp.eq.s32.totalorder %s18, 1
      %p53 = por %p51, %p52
      %p55 = scmp.ne.s32.totalorder %s38, %s54
      %p56 = scmp.eq.s32.totalorder %s18, 0
      %p57 = por %p55, %p56
      %s58 = ssub.s32 %s19, %s31
      %s59 = ssub.s32 %s20, %s27
      %s60 = sor.u32 %s58, %s59
      %p61 = scmp.eq.s32.totalorder %s60, 0
      %s63 = sadd.s32 %s62, 1
      %s64 = scalar_select %p61, %s62, %s63
      %p67 = pneg %p61
      %p68 = scmp.eq.s32.totalorder %s12, 1
      %p69 = por %p67, %p68
      %p70 = scmp.ne.s32.totalorder %s62, %s65
      %p71 = scmp.eq.s32.totalorder %s12, 0
      %p72 = por %p70, %p71
      %p73 = scmp.ne.s32.totalorder %s62, %s65
      %p74 = scmp.eq.s32.totalorder %s17, 1
      %p75 = por %p73, %p74
      %p76 = scmp.ne.s32.totalorder %s65, %s66
      %p77 = scmp.eq.s32.totalorder %s17, 0
      %p78 = por %p76, %p77
      %p79 = scmp.ne.s32.totalorder %s65, %s66
      %p80 = scmp.eq.s32.totalorder %s18, 1
      %p81 = por %p79, %p80
      %p83 = scmp.ne.s32.totalorder %s66, %s82
      %p84 = scmp.eq.s32.totalorder %s18, 0
      %p85 = por %p83, %p84
      %s86 = ssub.s32 %s19, %s31
      %s87 = ssub.s32 %s20, %s27
      %s88 = sor.u32 %s86, %s87
      %p89 = scmp.eq.s32.totalorder %s88, 0
      %s91 = sadd.s32 %s90, 1
      %s92 = scalar_select %p89, %s90, %s91
      %p95 = pneg %p89
      %p96 = scmp.eq.s32.totalorder %s12, 1
      %p97 = por %p95, %p96
      %p98 = scmp.ne.s32.totalorder %s90, %s93
      %p99 = scmp.eq.s32.totalorder %s12, 0
      %p100 = por %p98, %p99
      %p101 = scmp.ne.s32.totalorder %s90, %s93
      %p102 = scmp.eq.s32.totalorder %s17, 1
      %p103 = por %p101, %p102
      %p104 = scmp.ne.s32.totalorder %s93, %s94
      %p105 = scmp.eq.s32.totalorder %s17, 0
      %p106 = por %p104, %p105
      %p107 = scmp.ne.s32.totalorder %s93, %s94
      %p108 = scmp.eq.s32.totalorder %s18, 1
      %p109 = por %p107, %p108
      %p111 = scmp.ne.s32.totalorder %s94, %s110
      %p112 = scmp.eq.s32.totalorder %s18, 0
      %p113 = por %p111, %p112
      %s114 = ssub.s32 %s19, %s31
      %s115 = ssub.s32 %s20, %s27
      %s116 = sor.u32 %s114, %s115
      %p117 = scmp.eq.s32.totalorder %s116, 0
      %s119 = sadd.s32 %s118, 1
      %s120 = scalar_select %p117, %s118, %s119
      %p123 = pneg %p117
      %p124 = scmp.eq.s32.totalorder %s12, 1
      %p125 = por %p123, %p124
      %p126 = scmp.ne.s32.totalorder %s118, %s121
      %p127 = scmp.eq.s32.totalorder %s12, 0
      %p128 = por %p126, %p127
      %p129 = scmp.ne.s32.totalorder %s118, %s121
      %p130 = scmp.eq.s32.totalorder %s17, 1
      %p131 = por %p129, %p130
      %p132 = scmp.ne.s32.totalorder %s121, %s122
      %p133 = scmp.eq.s32.totalorder %s17, 0
      %p134 = por %p132, %p133
      %p135 = scmp.ne.s32.totalorder %s121, %s122
      %p136 = scmp.eq.s32.totalorder %s18, 1
      %p137 = por %p135, %p136
      %p139 = scmp.ne.s32.totalorder %s122, %s138
      %p140 = scmp.eq.s32.totalorder %s18, 0
      %p141 = por %p139, %p140
      %p142 = scmp.le.s32.totalorder 1, %s12
      %p143 = scmp.lt.s32.totalorder %s12, 3
      %p144 = pnand %p142, %p143
      %p145 = pneg %p144
      // Predicated region
      $region9: #{flatten_head.1} parent=5 // pred_check
        _
      $region10: #{flatten_head.1} parent=5 // pred_check_branch
        %147 = sbr.rel (%p144) target = $region12
      $region11: #{flatten_head.1} parent=5 // pred_region
        %s148 = ssub.s32 %s12, 1
      $region12: #{flatten_head.1} parent=5 // pred_fallthru
        _
      %p149 = scmp.lt.s32.totalorder %s12, 2
      // Predicated region
      $region13: #{flatten_head.1} parent=5 // pred_check
        %p150 = pneg %p149
      $region14: #{flatten_head.1} parent=5 // pred_check_branch
        %152 = sbr.rel (%p150) target = $region16
      $region15: #{flatten_head.1} parent=5 // pred_region
        // Predicated region
        $region17: #{flatten_head.1} parent=15 // pred_check
          %p153 = pneg %p44
        $region18: #{flatten_head.1} parent=15 // pred_check_branch
          %155 = sbr.rel (%p153) target = $region20
        $region19: #{flatten_head.1} parent=15 // pred_region
          %s156 = smul.u32 2, %s19
          %p157 = scmp.lt.s32.totalorder %s156, 3
          %s158 = scalar_select %p157, %s156, 3
          %s159 = smul.addr %s158, 4
          %s160 = scalar_lea.vmem %s0, %s159
          %s161 = smul.u32 2, %s19
        $region20: #{flatten_head.1} parent=15 // pred_fallthru
          _
        // Predicated region
        $region21: #{flatten_head.1} parent=15 // pred_check
          %p162 = pneg %p72
        $region22: #{flatten_head.1} parent=15 // pred_check_branch
          %164 = sbr.rel (%p162) target = $region24
        $region23: #{flatten_head.1} parent=15 // pred_region
          %s165 = sand.u32 %s62, 1
          %s166 = scalar_lea.sflag [#allocation3], %s165
          %s167 = sand.u32 %s62, 1
          %s168 = smul.addr %s167, 512
          %s169 = scalar_lea.vmem [#allocation2], %s168
          %s170 = smul.u32 2, %s19
          %s172 = ssub.s32 8192, 8192
          %173 = vsyncadd %s166, %s172
          %s174 = smul.addr %s170, 64
          %s175 = sadd.s32 %s20, %s174
          %s176 = smul.addr %s175, 64
          %s177 = scalar_lea.hbm %s1, %s176
          %s178 = sshll.u32 %s169, 4
          %s179 = int_to_ptr.vmem [resolvable:$true] %s178
          %184 = dma.hbm_to_vmem [thread:$0]  %s177, 8192, %s179, %s166, 64, 64, 4
        $region24: #{flatten_head.1} parent=15 // pred_fallthru
          _
        // Predicated region
        $region25: #{flatten_head.1} parent=15 // pred_check
          %p185 = pneg %p100
        $region26: #{flatten_head.1} parent=15 // pred_check_branch
          %187 = sbr.rel (%p185) target = $region28
        $region27: #{flatten_head.1} parent=15 // pred_region
          %s188 = smul.u32 2, %s19
          %p189 = scmp.lt.s32.totalorder %s188, 3
          %s190 = scalar_select %p189, %s188, 3
          %p191 = scmp.lt.s32.totalorder %s20, 0
          %s192 = scalar_select %p191, %s20, 0
          %s193 = sadd.s32 %s192, %s190
          %s194 = scalar_lea.vmem %s2, %s193
          %s195 = smul.u32 2, %s19
        $region28: #{flatten_head.1} parent=15 // pred_fallthru
          _
      $region16: #{flatten_head.1} parent=5 // pred_fallthru
        _
      %p196 = scmp.le.s32.totalorder 1, %s12
      %p197 = scmp.lt.s32.totalorder %s12, 3
      %p198 = pnand %p196, %p197
      %p199 = pneg %p198
      // Predicated region
      $region29: #{flatten_head.1} parent=5 // pred_check
        _
      $region30: #{flatten_head.1} parent=5 // pred_check_branch
        %201 = sbr.rel (%p198) target = $region32
      $region31: #{flatten_head.1} parent=5 // pred_region
        %s202 = ssub.s32 %s12, 1
        %s203 = sand.u32 %s65, 1
        %s204 = scalar_lea.sflag [#allocation3], %s203
        %s205 = sand.u32 %s65, 1
        %s206 = smul.addr %s205, 512
        %s207 = scalar_lea.vmem [#allocation2], %s206
        // Predicated region
        $region33: #{flatten_head.1} parent=31 // pred_check
          %p208 = pneg %p78
        $region34: #{flatten_head.1} parent=31 // pred_check_branch
          %210 = sbr.rel (%p208) target = $region36
        $region35: #{flatten_head.1} parent=31 // pred_region
          %211 = dma.done %s204, 8192
        $region36: #{flatten_head.1} parent=31 // pred_fallthru
          _
        %s212 = smul.u32 2, %s21
        %p213 = scmp.lt.s32.totalorder %s212, 3
        %s214 = scalar_select %p213, %s212, 3
        %s215 = smul.addr %s214, 4
        %s216 = scalar_lea.vmem %s0, %s215
        %p217 = pneg %p50
        %p218 = pneg %p47
        %s219 = sand.u32 %s65, 1
        %s220 = scalar_lea.sflag [#allocation3], %s219
        %s221 = sand.u32 %s65, 1
        %s222 = smul.addr %s221, 512
        %s223 = scalar_lea.vmem [#allocation2], %s222
        %p224 = pneg %p78
        %p225 = pneg %p75
        %s226 = smul.u32 2, %s21
        %p227 = scmp.lt.s32.totalorder %s226, 3
        %s228 = scalar_select %p227, %s226, 3
        %p229 = scmp.lt.s32.totalorder %s22, 0
        %s230 = scalar_select %p229, %s22, 0
        %s231 = sadd.s32 %s230, %s228
        %s232 = scalar_lea.vmem %s2, %s231
        %p233 = pneg %p106
        %p234 = pneg %p103
        %p235 = pneg %p134
        %p236 = pneg %p131
        %s237 = smul.u32 2, %s21
        %p238 = scmp.lt.s32.totalorder %s237, 3
        %s239 = scalar_select %p238, %s237, 3
        %p240 = scmp.lt.s32.totalorder %s22, 0
        %s241 = scalar_select %p240, %s22, 0
        %s242 = sadd.s32 %s241, %s239
        %s243 = smul.addr %s242, 2
        %s244 = scalar_lea.vmem %s3, %s243
        %s245 = smul.u32 2, %s21
        %p246 = scmp.lt.s32.totalorder %s245, 3
        %s247 = scalar_select %p246, %s245, 3
        %s248 = smul.addr %s247, 4
        %s249 = scalar_lea.vmem %s0, %s248
        %s250 = smul.u32 2, %s21
        %s251 = smul.u32 2, %s21
        %s252 = smul.u32 2, %s21
        %p253 = scmp.lt.s32.totalorder %s252, 3
        %s254 = scalar_select %p253, %s252, 3
        %p255 = scmp.lt.s32.totalorder %s22, 0
        %s256 = scalar_select %p255, %s22, 0
        %s257 = sadd.s32 %s256, %s254
        %s258 = scalar_lea.vmem %s2, %s257
        %s259 = smul.u32 2, %s21
        %s260 = smul.u32 2, %s21
        %p261 = scmp.lt.s32.totalorder %s260, 3
        %s262 = scalar_select %p261, %s260, 3
        %p263 = scmp.lt.s32.totalorder %s22, 0
        %s264 = scalar_select %p263, %s22, 0
        %s265 = sadd.s32 %s264, %s262
        %s266 = smul.addr %s265, 2
        %s267 = scalar_lea.vmem %s3, %s266
        %s268 = smul.u32 2, %s21
        %v270 = vld [vmem:[%s249] sm:$0xf]
        %v271 = vld [vmem:[%s207] sm:$0xf]
        %v272 = vld [vmem:[%s207 + $0x4] sm:$0xf]
        %v273 = vld [vmem:[%s207 + $0x8] sm:$0xf]
        %v274 = vld [vmem:[%s207 + $0xc] sm:$0xf]
        %v275 = vld [vmem:[%s207 + $0x10] sm:$0xf]
        %v276 = vld [vmem:[%s207 + $0x14] sm:$0xf]
        %v277 = vld [vmem:[%s207 + $0x18] sm:$0xf]
        %v278 = vld [vmem:[%s207 + $0x1c] sm:$0xf]
        %v279 = vld [vmem:[%s207 + $0x20] sm:$0xf]
        %v280 = vld [vmem:[%s207 + $0x24] sm:$0xf]
        %v281 = vld [vmem:[%s207 + $0x28] sm:$0xf]
        %v282 = vld [vmem:[%s207 + $0x2c] sm:$0xf]
        %v283 = vld [vmem:[%s207 + $0x30] sm:$0xf]
        %v284 = vld [vmem:[%s207 + $0x34] sm:$0xf]
        %v285 = vld [vmem:[%s207 + $0x38] sm:$0xf]
        %v286 = vld [vmem:[%s207 + $0x3c] sm:$0xf]
        %v287 = vld [vmem:[%s207 + $0x40] sm:$0xf]
        %v288 = vld [vmem:[%s207 + $0x44] sm:$0xf]
        %v289 = vld [vmem:[%s207 + $0x48] sm:$0xf]
        %v290 = vld [vmem:[%s207 + $0x4c] sm:$0xf]
        %v291 = vld [vmem:[%s207 + $0x50] sm:$0xf]
        %v292 = vld [vmem:[%s207 + $0x54] sm:$0xf]
        %v293 = vld [vmem:[%s207 + $0x58] sm:$0xf]
        %v294 = vld [vmem:[%s207 + $0x5c] sm:$0xf]
        %v295 = vld [vmem:[%s207 + $0x60] sm:$0xf]
        %v296 = vld [vmem:[%s207 + $0x64] sm:$0xf]
        %v297 = vld [vmem:[%s207 + $0x68] sm:$0xf]
        %v298 = vld [vmem:[%s207 + $0x6c] sm:$0xf]
        %v299 = vld [vmem:[%s207 + $0x70] sm:$0xf]
        %v300 = vld [vmem:[%s207 + $0x74] sm:$0xf]
        %v301 = vld [vmem:[%s207 + $0x78] sm:$0xf]
        %v302 = vld [vmem:[%s207 + $0x7c] sm:$0xf]
        %v303 = vld [vmem:[%s207 + $0x80] sm:$0xf]
        %v304 = vld [vmem:[%s207 + $0x84] sm:$0xf]
        %v305 = vld [vmem:[%s207 + $0x88] sm:$0xf]
        %v306 = vld [vmem:[%s207 + $0x8c] sm:$0xf]
        %v307 = vld [vmem:[%s207 + $0x90] sm:$0xf]
        %v308 = vld [vmem:[%s207 + $0x94] sm:$0xf]
        %v309 = vld [vmem:[%s207 + $0x98] sm:$0xf]
        %v310 = vld [vmem:[%s207 + $0x9c] sm:$0xf]
        %v311 = vld [vmem:[%s207 + $0xa0] sm:$0xf]
        %v312 = vld [vmem:[%s207 + $0xa4] sm:$0xf]
        %v313 = vld [vmem:[%s207 + $0xa8] sm:$0xf]
        %v314 = vld [vmem:[%s207 + $0xac] sm:$0xf]
        %v315 = vld [vmem:[%s207 + $0xb0] sm:$0xf]
        %v316 = vld [vmem:[%s207 + $0xb4] sm:$0xf]
        %v317 = vld [vmem:[%s207 + $0xb8] sm:$0xf]
        %v318 = vld [vmem:[%s207 + $0xbc] sm:$0xf]
        %v319 = vld [vmem:[%s207 + $0xc0] sm:$0xf]
        %v320 = vld [vmem:[%s207 + $0xc4] sm:$0xf]
        %v321 = vld [vmem:[%s207 + $0xc8] sm:$0xf]
        %v322 = vld [vmem:[%s207 + $0xcc] sm:$0xf]
        %v323 = vld [vmem:[%s207 + $0xd0] sm:$0xf]
        %v324 = vld [vmem:[%s207 + $0xd4] sm:$0xf]
        %v325 = vld [vmem:[%s207 + $0xd8] sm:$0xf]
        %v326 = vld [vmem:[%s207 + $0xdc] sm:$0xf]
        %v327 = vld [vmem:[%s207 + $0xe0] sm:$0xf]
        %v328 = vld [vmem:[%s207 + $0xe4] sm:$0xf]
        %v329 = vld [vmem:[%s207 + $0xe8] sm:$0xf]
        %v330 = vld [vmem:[%s207 + $0xec] sm:$0xf]
        %v331 = vld [vmem:[%s207 + $0xf0] sm:$0xf]
        %v332 = vld [vmem:[%s207 + $0xf4] sm:$0xf]
        %v333 = vld [vmem:[%s207 + $0xf8] sm:$0xf]
        %v334 = vld [vmem:[%s207 + $0xfc] sm:$0xf]
        %v335 = vld [vmem:[%s258] sm:$0x1]
        %v337 = vlaneseq
        %v338 = vshrl.u32 %v337, 7
        %v339 = vsub.s32 0, %v338
        %v340 = vrot.slane %v335, %v339
        %v344 = vunpack.c.l.s4 1966171168
        %v345 = vunpack.c.0.s8 %v344
        %v346 = vlaneseq
        %v347 = vshrl.u32 %v346, 7
        %v348 = vsub.s32 %v345, %v347
        %v349 = vrot.slane %v270, %v348
        %v350 = vcombine.high %v349, %v349
        %v352 = vunpack.c.l.s4 1966171168
        %v353 = vunpack.c.0.s8 %v352
        %v354 = vlaneseq
        %v355 = vshrl.u32 %v354, 7
        %v356 = vsub.s32 %v353, %v355
        %v357 = vrot.slane %v349, %v356
        %v359 = vunpack.c.l.s4 1966171168
        %v360 = vunpack.c.0.s8 %v359
        %v361 = vlaneseq
        %v362 = vshrl.u32 %v361, 7
        %v363 = vsub.s32 %v360, %v362
        %v364 = vrot.slane %v350, %v363
        %v365 = vcombine.high %v357, %v357
        %v366 = vcombine.high %v364, %v364
        %v435 = vunpack.c.l.b16 %v271
        %v436 = vunpack.c.l.b16 %v272
        %v437 = vunpack.c.l.b16 %v273
        %v438 = vunpack.c.l.b16 %v274
        %v439 = vunpack.c.l.b16 %v275
        %v440 = vunpack.c.l.b16 %v276
        %v441 = vunpack.c.l.b16 %v277
        %v442 = vunpack.c.l.b16 %v278
        %v443 = vunpack.c.l.b16 %v279
        %v444 = vunpack.c.l.b16 %v280
        %v445 = vunpack.c.l.b16 %v281
        %v446 = vunpack.c.l.b16 %v282
        %v447 = vunpack.c.l.b16 %v283
        %v448 = vunpack.c.l.b16 %v284
        %v449 = vunpack.c.l.b16 %v285
        %v450 = vunpack.c.l.b16 %v286
        %v451 = vunpack.c.l.b16 %v287
        %v452 = vunpack.c.l.b16 %v288
        %v453 = vunpack.c.l.b16 %v289
        %v454 = vunpack.c.l.b16 %v290
        %v455 = vunpack.c.l.b16 %v291
        %v456 = vunpack.c.l.b16 %v292
        %v457 = vunpack.c.l.b16 %v293
        %v458 = vunpack.c.l.b16 %v294
        %v459 = vunpack.c.l.b16 %v295
        %v460 = vunpack.c.l.b16 %v296
        %v461 = vunpack.c.l.b16 %v297
        %v462 = vunpack.c.l.b16 %v298
        %v463 = vunpack.c.l.b16 %v299
        %v464 = vunpack.c.l.b16 %v300
        %v465 = vunpack.c.l.b16 %v301
        %v466 = vunpack.c.l.b16 %v302
        %v467 = vunpack.c.l.b16 %v303
        %v468 = vunpack.c.l.b16 %v304
        %v469 = vunpack.c.l.b16 %v305
        %v470 = vunpack.c.l.b16 %v306
        %v471 = vunpack.c.l.b16 %v307
        %v472 = vunpack.c.l.b16 %v308
        %v473 = vunpack.c.l.b16 %v309
        %v474 = vunpack.c.l.b16 %v310
        %v475 = vunpack.c.l.b16 %v311
        %v476 = vunpack.c.l.b16 %v312
        %v477 = vunpack.c.l.b16 %v313
        %v478 = vunpack.c.l.b16 %v314
        %v479 = vunpack.c.l.b16 %v315
        %v480 = vunpack.c.l.b16 %v316
        %v481 = vunpack.c.l.b16 %v317
        %v482 = vunpack.c.l.b16 %v318
        %v483 = vunpack.c.l.b16 %v319
        %v484 = vunpack.c.l.b16 %v320
        %v485 = vunpack.c.l.b16 %v321
        %v486 = vunpack.c.l.b16 %v322
        %v487 = vunpack.c.l.b16 %v323
        %v488 = vunpack.c.l.b16 %v324
        %v489 = vunpack.c.l.b16 %v325
        %v490 = vunpack.c.l.b16 %v326
        %v491 = vunpack.c.l.b16 %v327
        %v492 = vunpack.c.l.b16 %v328
        %v493 = vunpack.c.l.b16 %v329
        %v494 = vunpack.c.l.b16 %v330
        %v495 = vunpack.c.l.b16 %v331
        %v496 = vunpack.c.l.b16 %v332
        %v497 = vunpack.c.l.b16 %v333
        %v498 = vunpack.c.l.b16 %v334
        %v499 = vpack.c.b16 %v436, %v435
        %v500 = vpack.c.b16 %v438, %v437
        %v501 = vpack.c.b16 %v440, %v439
        %v502 = vpack.c.b16 %v442, %v441
        %v503 = vpack.c.b16 %v444, %v443
        %v504 = vpack.c.b16 %v446, %v445
        %v505 = vpack.c.b16 %v448, %v447
        %v506 = vpack.c.b16 %v450, %v449
        %v507 = vpack.c.b16 %v452, %v451
        %v508 = vpack.c.b16 %v454, %v453
        %v509 = vpack.c.b16 %v456, %v455
        %v510 = vpack.c.b16 %v458, %v457
        %v511 = vpack.c.b16 %v460, %v459
        %v512 = vpack.c.b16 %v462, %v461
        %v513 = vpack.c.b16 %v464, %v463
        %v514 = vpack.c.b16 %v466, %v465
        %v515 = vpack.c.b16 %v468, %v467
        %v516 = vpack.c.b16 %v470, %v469
        %v517 = vpack.c.b16 %v472, %v471
        %v518 = vpack.c.b16 %v474, %v473
        %v519 = vpack.c.b16 %v476, %v475
        %v520 = vpack.c.b16 %v478, %v477
        %v521 = vpack.c.b16 %v480, %v479
        %v522 = vpack.c.b16 %v482, %v481
        %v523 = vpack.c.b16 %v484, %v483
        %v524 = vpack.c.b16 %v486, %v485
        %v525 = vpack.c.b16 %v488, %v487
        %v526 = vpack.c.b16 %v490, %v489
        %v527 = vpack.c.b16 %v492, %v491
        %v528 = vpack.c.b16 %v494, %v493
        %v529 = vpack.c.b16 %v496, %v495
        %v530 = vpack.c.b16 %v498, %v497
        %563 = vmatprep.subr.bf16.mxu0 0
        %564 = vmatpush1.bf16.msra.mxu0 %v499
        %565 = vmatprep.subr.bf16.mxu0 0
        %566 = vmatpush1.bf16.msra.mxu0 %v500
        %567 = vmatprep.subr.bf16.mxu0 0
        %568 = vmatpush1.bf16.msra.mxu0 %v501
        %569 = vmatprep.subr.bf16.mxu0 0
        %570 = vmatpush1.bf16.msra.mxu0 %v502
        %571 = vmatprep.subr.bf16.mxu0 0
        %572 = vmatpush1.bf16.msra.mxu0 %v503
        %573 = vmatprep.subr.bf16.mxu0 0
        %574 = vmatpush1.bf16.msra.mxu0 %v504
        %575 = vmatprep.subr.bf16.mxu0 0
        %576 = vmatpush1.bf16.msra.mxu0 %v505
        %577 = vmatprep.subr.bf16.mxu0 0
        %578 = vmatpush1.bf16.msra.mxu0 %v506
        %579 = vmatprep.subr.bf16.mxu0 0
        %580 = vmatpush1.bf16.msra.mxu0 %v507
        %581 = vmatprep.subr.bf16.mxu0 0
        %582 = vmatpush1.bf16.msra.mxu0 %v508
        %583 = vmatprep.subr.bf16.mxu0 0
        %584 = vmatpush1.bf16.msra.mxu0 %v509
        %585 = vmatprep.subr.bf16.mxu0 0
        %586 = vmatpush1.bf16.msra.mxu0 %v510
        %587 = vmatprep.subr.bf16.mxu0 0
        %588 = vmatpush1.bf16.msra.mxu0 %v511
        %589 = vmatprep.subr.bf16.mxu0 0
        %590 = vmatpush1.bf16.msra.mxu0 %v512
        %591 = vmatprep.subr.bf16.mxu0 0
        %592 = vmatpush1.bf16.msra.mxu0 %v513
        %593 = vmatprep.subr.bf16.mxu0 0
        %594 = vmatpush1.bf16.msra.mxu0 %v514
        %595 = vmatprep.mubr.bf16.mxu0 %v364
        %596 = vmatmul.mubr.bf16.gmra.mrb[0].mxu0 %v357
        %v597 = vpop.f32.mrb[0].mxu0
        %v598 = vadd.f32 %v340, %v597
        %v599 = vpop.f32.mrb[0].mxu0
        %v600 = vpop.f32.mrb[0].mxu0
        %v601 = vpop.f32.mrb[0].mxu0
        %602 = vdwg.mxu0
        %603 = vmatprep.subr.bf16.mxu0 0
        %604 = vmatpush1.bf16.msra.mxu0 %v515
        %605 = vmatprep.subr.bf16.mxu0 0
        %606 = vmatpush1.bf16.msra.mxu0 %v516
        %607 = vmatprep.subr.bf16.mxu0 0
        %608 = vmatpush1.bf16.msra.mxu0 %v517
        %609 = vmatprep.subr.bf16.mxu0 0
        %610 = vmatpush1.bf16.msra.mxu0 %v518
        %611 = vmatprep.subr.bf16.mxu0 0
        %612 = vmatpush1.bf16.msra.mxu0 %v519
        %613 = vmatprep.subr.bf16.mxu0 0
        %614 = vmatpush1.bf16.msra.mxu0 %v520
        %615 = vmatprep.subr.bf16.mxu0 0
        %616 = vmatpush1.bf16.msra.mxu0 %v521
        %617 = vmatprep.subr.bf16.mxu0 0
        %618 = vmatpush1.bf16.msra.mxu0 %v522
        %619 = vmatprep.subr.bf16.mxu0 0
        %620 = vmatpush1.bf16.msra.mxu0 %v523
        %621 = vmatprep.subr.bf16.mxu0 0
        %622 = vmatpush1.bf16.msra.mxu0 %v524
        %623 = vmatprep.subr.bf16.mxu0 0
        %624 = vmatpush1.bf16.msra.mxu0 %v525
        %625 = vmatprep.subr.bf16.mxu0 0
        %626 = vmatpush1.bf16.msra.mxu0 %v526
        %627 = vmatprep.subr.bf16.mxu0 0
        %628 = vmatpush1.bf16.msra.mxu0 %v527
        %629 = vmatprep.subr.bf16.mxu0 0
        %630 = vmatpush1.bf16.msra.mxu0 %v528
        %631 = vmatprep.subr.bf16.mxu0 0
        %632 = vmatpush1.bf16.msra.mxu0 %v529
        %633 = vmatprep.subr.bf16.mxu0 0
        %634 = vmatpush1.bf16.msra.mxu0 %v530
        %635 = vmatprep.mubr.bf16.mxu0 %v366
        %636 = vmatmul.mubr.bf16.gmra.mrb[0].mxu0 %v365
        %v637 = vpop.f32.mrb[0].mxu0
        %v638 = vadd.f32 %v598, %v637
        %v639 = vpop.f32.mrb[0].mxu0
        %v640 = vpop.f32.mrb[0].mxu0
        %v641 = vpop.f32.mrb[0].mxu0
        %642 = vdwg.mxu0
        %643 = vst [vmem:[%s267] sm:$0x3] %v638
        %s644 = scalar_lea.vmem %s249, 4
        %v645 = vld [vmem:[%s644] sm:$0xf]
        %s646 = scalar_lea.vmem %s207, 256 [#allocation2]
        %v647 = vld [vmem:[%s646] sm:$0xf]
        %v648 = vld [vmem:[%s646 + $0x4] sm:$0xf]
        %v649 = vld [vmem:[%s646 + $0x8] sm:$0xf]
        %v650 = vld [vmem:[%s646 + $0xc] sm:$0xf]
        %v651 = vld [vmem:[%s646 + $0x10] sm:$0xf]
        %v652 = vld [vmem:[%s646 + $0x14] sm:$0xf]
        %v653 = vld [vmem:[%s646 + $0x18] sm:$0xf]
        %v654 = vld [vmem:[%s646 + $0x1c] sm:$0xf]
        %v655 = vld [vmem:[%s646 + $0x20] sm:$0xf]
        %v656 = vld [vmem:[%s646 + $0x24] sm:$0xf]
        %v657 = vld [vmem:[%s646 + $0x28] sm:$0xf]
        %v658 = vld [vmem:[%s646 + $0x2c] sm:$0xf]
        %v659 = vld [vmem:[%s646 + $0x30] sm:$0xf]
        %v660 = vld [vmem:[%s646 + $0x34] sm:$0xf]
        %v661 = vld [vmem:[%s646 + $0x38] sm:$0xf]
        %v662 = vld [vmem:[%s646 + $0x3c] sm:$0xf]
        %v663 = vld [vmem:[%s646 + $0x40] sm:$0xf]
        %v664 = vld [vmem:[%s646 + $0x44] sm:$0xf]
        %v665 = vld [vmem:[%s646 + $0x48] sm:$0xf]
        %v666 = vld [vmem:[%s646 + $0x4c] sm:$0xf]
        %v667 = vld [vmem:[%s646 + $0x50] sm:$0xf]
        %v668 = vld [vmem:[%s646 + $0x54] sm:$0xf]
        %v669 = vld [vmem:[%s646 + $0x58] sm:$0xf]
        %v670 = vld [vmem:[%s646 + $0x5c] sm:$0xf]
        %v671 = vld [vmem:[%s646 + $0x60] sm:$0xf]
        %v672 = vld [vmem:[%s646 + $0x64] sm:$0xf]
        %v673 = vld [vmem:[%s646 + $0x68] sm:$0xf]
        %v674 = vld [vmem:[%s646 + $0x6c] sm:$0xf]
        %v675 = vld [vmem:[%s646 + $0x70] sm:$0xf]
        %v676 = vld [vmem:[%s646 + $0x74] sm:$0xf]
        %v677 = vld [vmem:[%s646 + $0x78] sm:$0xf]
        %v678 = vld [vmem:[%s646 + $0x7c] sm:$0xf]
        %v679 = vld [vmem:[%s646 + $0x80] sm:$0xf]
        %v680 = vld [vmem:[%s646 + $0x84] sm:$0xf]
        %v681 = vld [vmem:[%s646 + $0x88] sm:$0xf]
        %v682 = vld [vmem:[%s646 + $0x8c] sm:$0xf]
        %v683 = vld [vmem:[%s646 + $0x90] sm:$0xf]
        %v684 = vld [vmem:[%s646 + $0x94] sm:$0xf]
        %v685 = vld [vmem:[%s646 + $0x98] sm:$0xf]
        %v686 = vld [vmem:[%s646 + $0x9c] sm:$0xf]
        %v687 = vld [vmem:[%s646 + $0xa0] sm:$0xf]
        %v688 = vld [vmem:[%s646 + $0xa4] sm:$0xf]
        %v689 = vld [vmem:[%s646 + $0xa8] sm:$0xf]
        %v690 = vld [vmem:[%s646 + $0xac] sm:$0xf]
        %v691 = vld [vmem:[%s646 + $0xb0] sm:$0xf]
        %v692 = vld [vmem:[%s646 + $0xb4] sm:$0xf]
        %v693 = vld [vmem:[%s646 + $0xb8] sm:$0xf]
        %v694 = vld [vmem:[%s646 + $0xbc] sm:$0xf]
        %v695 = vld [vmem:[%s646 + $0xc0] sm:$0xf]
        %v696 = vld [vmem:[%s646 + $0xc4] sm:$0xf]
        %v697 = vld [vmem:[%s646 + $0xc8] sm:$0xf]
        %v698 = vld [vmem:[%s646 + $0xcc] sm:$0xf]
        %v699 = vld [vmem:[%s646 + $0xd0] sm:$0xf]
        %v700 = vld [vmem:[%s646 + $0xd4] sm:$0xf]
        %v701 = vld [vmem:[%s646 + $0xd8] sm:$0xf]
        %v702 = vld [vmem:[%s646 + $0xdc] sm:$0xf]
        %v703 = vld [vmem:[%s646 + $0xe0] sm:$0xf]
        %v704 = vld [vmem:[%s646 + $0xe4] sm:$0xf]
        %v705 = vld [vmem:[%s646 + $0xe8] sm:$0xf]
        %v706 = vld [vmem:[%s646 + $0xec] sm:$0xf]
        %v707 = vld [vmem:[%s646 + $0xf0] sm:$0xf]
        %v708 = vld [vmem:[%s646 + $0xf4] sm:$0xf]
        %v709 = vld [vmem:[%s646 + $0xf8] sm:$0xf]
        %v710 = vld [vmem:[%s646 + $0xfc] sm:$0xf]
        %s711 = scalar_lea.vmem %s258, 1
        %v712 = vld [vmem:[%s711] sm:$0x1]
        %v714 = vlaneseq
        %v715 = vshrl.u32 %v714, 7
        %v716 = vsub.s32 0, %v715
        %v717 = vrot.slane %v712, %v716
        %v721 = vunpack.c.l.s4 1966171168
        %v722 = vunpack.c.0.s8 %v721
        %v723 = vlaneseq
        %v724 = vshrl.u32 %v723, 7
        %v725 = vsub.s32 %v722, %v724
        %v726 = vrot.slane %v645, %v725
        %v727 = vcombine.high %v726, %v726
        %v729 = vunpack.c.l.s4 1966171168
        %v730 = vunpack.c.0.s8 %v729
        %v731 = vlaneseq
        %v732 = vshrl.u32 %v731, 7
        %v733 = vsub.s32 %v730, %v732
        %v734 = vrot.slane %v726, %v733
        %v736 = vunpack.c.l.s4 1966171168
        %v737 = vunpack.c.0.s8 %v736
        %v738 = vlaneseq
        %v739 = vshrl.u32 %v738, 7
        %v740 = vsub.s32 %v737, %v739
        %v741 = vrot.slane %v727, %v740
        %v742 = vcombine.high %v734, %v734
        %v743 = vcombine.high %v741, %v741
        %v812 = vunpack.c.l.b16 %v647
        %v813 = vunpack.c.l.b16 %v648
        %v814 = vunpack.c.l.b16 %v649
        %v815 = vunpack.c.l.b16 %v650
        %v816 = vunpack.c.l.b16 %v651
        %v817 = vunpack.c.l.b16 %v652
        %v818 = vunpack.c.l.b16 %v653
        %v819 = vunpack.c.l.b16 %v654
        %v820 = vunpack.c.l.b16 %v655
        %v821 = vunpack.c.l.b16 %v656
        %v822 = vunpack.c.l.b16 %v657
        %v823 = vunpack.c.l.b16 %v658
        %v824 = vunpack.c.l.b16 %v659
        %v825 = vunpack.c.l.b16 %v660
        %v826 = vunpack.c.l.b16 %v661
        %v827 = vunpack.c.l.b16 %v662
        %v828 = vunpack.c.l.b16 %v663
        %v829 = vunpack.c.l.b16 %v664
        %v830 = vunpack.c.l.b16 %v665
        %v831 = vunpack.c.l.b16 %v666
        %v832 = vunpack.c.l.b16 %v667
        %v833 = vunpack.c.l.b16 %v668
        %v834 = vunpack.c.l.b16 %v669
        %v835 = vunpack.c.l.b16 %v670
        %v836 = vunpack.c.l.b16 %v671
        %v837 = vunpack.c.l.b16 %v672
        %v838 = vunpack.c.l.b16 %v673
        %v839 = vunpack.c.l.b16 %v674
        %v840 = vunpack.c.l.b16 %v675
        %v841 = vunpack.c.l.b16 %v676
        %v842 = vunpack.c.l.b16 %v677
        %v843 = vunpack.c.l.b16 %v678
        %v844 = vunpack.c.l.b16 %v679
        %v845 = vunpack.c.l.b16 %v680
        %v846 = vunpack.c.l.b16 %v681
        %v847 = vunpack.c.l.b16 %v682
        %v848 = vunpack.c.l.b16 %v683
        %v849 = vunpack.c.l.b16 %v684
        %v850 = vunpack.c.l.b16 %v685
        %v851 = vunpack.c.l.b16 %v686
        %v852 = vunpack.c.l.b16 %v687
        %v853 = vunpack.c.l.b16 %v688
        %v854 = vunpack.c.l.b16 %v689
        %v855 = vunpack.c.l.b16 %v690
        %v856 = vunpack.c.l.b16 %v691
        %v857 = vunpack.c.l.b16 %v692
        %v858 = vunpack.c.l.b16 %v693
        %v859 = vunpack.c.l.b16 %v694
        %v860 = vunpack.c.l.b16 %v695
        %v861 = vunpack.c.l.b16 %v696
        %v862 = vunpack.c.l.b16 %v697
        %v863 = vunpack.c.l.b16 %v698
        %v864 = vunpack.c.l.b16 %v699
        %v865 = vunpack.c.l.b16 %v700
        %v866 = vunpack.c.l.b16 %v701
        %v867 = vunpack.c.l.b16 %v702
        %v868 = vunpack.c.l.b16 %v703
        %v869 = vunpack.c.l.b16 %v704
        %v870 = vunpack.c.l.b16 %v705
        %v871 = vunpack.c.l.b16 %v706
        %v872 = vunpack.c.l.b16 %v707
        %v873 = vunpack.c.l.b16 %v708
        %v874 = vunpack.c.l.b16 %v709
        %v875 = vunpack.c.l.b16 %v710
        %v876 = vpack.c.b16 %v813, %v812
        %v877 = vpack.c.b16 %v815, %v814
        %v878 = vpack.c.b16 %v817, %v816
        %v879 = vpack.c.b16 %v819, %v818
        %v880 = vpack.c.b16 %v821, %v820
        %v881 = vpack.c.b16 %v823, %v822
        %v882 = vpack.c.b16 %v825, %v824
        %v883 = vpack.c.b16 %v827, %v826
        %v884 = vpack.c.b16 %v829, %v828
        %v885 = vpack.c.b16 %v831, %v830
        %v886 = vpack.c.b16 %v833, %v832
        %v887 = vpack.c.b16 %v835, %v834
        %v888 = vpack.c.b16 %v837, %v836
        %v889 = vpack.c.b16 %v839, %v838
        %v890 = vpack.c.b16 %v841, %v840
        %v891 = vpack.c.b16 %v843, %v842
        %v892 = vpack.c.b16 %v845, %v844
        %v893 = vpack.c.b16 %v847, %v846
        %v894 = vpack.c.b16 %v849, %v848
        %v895 = vpack.c.b16 %v851, %v850
        %v896 = vpack.c.b16 %v853, %v852
        %v897 = vpack.c.b16 %v855, %v854
        %v898 = vpack.c.b16 %v857, %v856
        %v899 = vpack.c.b16 %v859, %v858
        %v900 = vpack.c.b16 %v861, %v860
        %v901 = vpack.c.b16 %v863, %v862
        %v902 = vpack.c.b16 %v865, %v864
        %v903 = vpack.c.b16 %v867, %v866
        %v904 = vpack.c.b16 %v869, %v868
        %v905 = vpack.c.b16 %v871, %v870
        %v906 = vpack.c.b16 %v873, %v872
        %v907 = vpack.c.b16 %v875, %v874
        %940 = vmatprep.subr.bf16.mxu0 0
        %941 = vmatpush1.bf16.msra.mxu0 %v876
        %942 = vmatprep.subr.bf16.mxu0 0
        %943 = vmatpush1.bf16.msra.mxu0 %v877
        %944 = vmatprep.subr.bf16.mxu0 0
        %945 = vmatpush1.bf16.msra.mxu0 %v878
        %946 = vmatprep.subr.bf16.mxu0 0
        %947 = vmatpush1.bf16.msra.mxu0 %v879
        %948 = vmatprep.subr.bf16.mxu0 0
        %949 = vmatpush1.bf16.msra.mxu0 %v880
        %950 = vmatprep.subr.bf16.mxu0 0
        %951 = vmatpush1.bf16.msra.mxu0 %v881
        %952 = vmatprep.subr.bf16.mxu0 0
        %953 = vmatpush1.bf16.msra.mxu0 %v882
        %954 = vmatprep.subr.bf16.mxu0 0
        %955 = vmatpush1.bf16.msra.mxu0 %v883
        %956 = vmatprep.subr.bf16.mxu0 0
        %957 = vmatpush1.bf16.msra.mxu0 %v884
        %958 = vmatprep.subr.bf16.mxu0 0
        %959 = vmatpush1.bf16.msra.mxu0 %v885
        %960 = vmatprep.subr.bf16.mxu0 0
        %961 = vmatpush1.bf16.msra.mxu0 %v886
        %962 = vmatprep.subr.bf16.mxu0 0
        %963 = vmatpush1.bf16.msra.mxu0 %v887
        %964 = vmatprep.subr.bf16.mxu0 0
        %965 = vmatpush1.bf16.msra.mxu0 %v888
        %966 = vmatprep.subr.bf16.mxu0 0
        %967 = vmatpush1.bf16.msra.mxu0 %v889
        %968 = vmatprep.subr.bf16.mxu0 0
        %969 = vmatpush1.bf16.msra.mxu0 %v890
        %970 = vmatprep.subr.bf16.mxu0 0
        %971 = vmatpush1.bf16.msra.mxu0 %v891
        %972 = vmatprep.mubr.bf16.mxu0 %v741
        %973 = vmatmul.mubr.bf16.gmra.mrb[0].mxu0 %v734
        %v974 = vpop.f32.mrb[0].mxu0
        %v975 = vadd.f32 %v717, %v974
        %v976 = vpop.f32.mrb[0].mxu0
        %v977 = vpop.f32.mrb[0].mxu0
        %v978 = vpop.f32.mrb[0].mxu0
        %979 = vdwg.mxu0
        %980 = vmatprep.subr.bf16.mxu0 0
        %981 = vmatpush1.bf16.msra.mxu0 %v892
        %982 = vmatprep.subr.bf16.mxu0 0
        %983 = vmatpush1.bf16.msra.mxu0 %v893
        %984 = vmatprep.subr.bf16.mxu0 0
        %985 = vmatpush1.bf16.msra.mxu0 %v894
        %986 = vmatprep.subr.bf16.mxu0 0
        %987 = vmatpush1.bf16.msra.mxu0 %v895
        %988 = vmatprep.subr.bf16.mxu0 0
        %989 = vmatpush1.bf16.msra.mxu0 %v896
        %990 = vmatprep.subr.bf16.mxu0 0
        %991 = vmatpush1.bf16.msra.mxu0 %v897
        %992 = vmatprep.subr.bf16.mxu0 0
        %993 = vmatpush1.bf16.msra.mxu0 %v898
        %994 = vmatprep.subr.bf16.mxu0 0
        %995 = vmatpush1.bf16.msra.mxu0 %v899
        %996 = vmatprep.subr.bf16.mxu0 0
        %997 = vmatpush1.bf16.msra.mxu0 %v900
        %998 = vmatprep.subr.bf16.mxu0 0
        %999 = vmatpush1.bf16.msra.mxu0 %v901
        %1000 = vmatprep.subr.bf16.mxu0 0
        %1001 = vmatpush1.bf16.msra.mxu0 %v902
        %1002 = vmatprep.subr.bf16.mxu0 0
        %1003 = vmatpush1.bf16.msra.mxu0 %v903
        %1004 = vmatprep.subr.bf16.mxu0 0
        %1005 = vmatpush1.bf16.msra.mxu0 %v904
        %1006 = vmatprep.subr.bf16.mxu0 0
        %1007 = vmatpush1.bf16.msra.mxu0 %v905
        %1008 = vmatprep.subr.bf16.mxu0 0
        %1009 = vmatpush1.bf16.msra.mxu0 %v906
        %1010 = vmatprep.subr.bf16.mxu0 0
        %1011 = vmatpush1.bf16.msra.mxu0 %v907
        %1012 = vmatprep.mubr.bf16.mxu0 %v743
        %1013 = vmatmul.mubr.bf16.gmra.mrb[0].mxu0 %v742
        %v1014 = vpop.f32.mrb[0].mxu0
        %v1015 = vadd.f32 %v975, %v1014
        %v1016 = vpop.f32.mrb[0].mxu0
        %v1017 = vpop.f32.mrb[0].mxu0
        %v1018 = vpop.f32.mrb[0].mxu0
        %1019 = vdwg.mxu0
        %s1020 = scalar_lea.vmem %s267, 2
        %1021 = vst [vmem:[%s1020] sm:$0x3] %v1015
        %s1022 = smul.u32 2, %s21
        %p1023 = scmp.lt.s32.totalorder %s1022, 3
        %s1024 = scalar_select %p1023, %s1022, 3
        %p1025 = scmp.lt.s32.totalorder %s22, 0
        %s1026 = scalar_select %p1025, %s22, 0
        %s1027 = sadd.s32 %s1026, %s1024
        %s1028 = smul.addr %s1027, 2
        %s1029 = scalar_lea.vmem %s3, %s1028
        // Predicated region
        $region37: #{flatten_head.1} parent=31 // pred_check
          %p1030 = pneg %p131
        $region38: #{flatten_head.1} parent=31 // pred_check_branch
          %1032 = sbr.rel (%p1030) target = $region40
        $region39: #{flatten_head.1} parent=31 // pred_region
          %s1033 = smul.u32 2, %s21
        $region40: #{flatten_head.1} parent=31 // pred_fallthru
          _
      $region32: #{flatten_head.1} parent=5 // pred_fallthru
        _
      %p1034 = scmp.le.s32.totalorder 2, %s12
      // Predicated region
      $region41: #{flatten_head.1} parent=5 // pred_check
        %p1035 = pneg %p1034
      $region42: #{flatten_head.1} parent=5 // pred_check_branch
        %1037 = sbr.rel (%p1035) target = $region44
      $region43: #{flatten_head.1} parent=5 // pred_region
        %s1038 = ssub.s32 %s12, 2
        // Predicated region
        $region45: #{flatten_head.1} parent=43 // pred_check
          %p1039 = pneg %p137
        $region46: #{flatten_head.1} parent=43 // pred_check_branch
          %1041 = sbr.rel (%p1039) target = $region48
        $region47: #{flatten_head.1} parent=43 // pred_region
          %s1042 = smul.u32 2, %s23
          %p1043 = scmp.lt.s32.totalorder %s1042, 3
          %s1044 = scalar_select %p1043, %s1042, 3
          %p1045 = scmp.lt.s32.totalorder %s24, 0
          %s1046 = scalar_select %p1045, %s24, 0
          %s1047 = sadd.s32 %s1046, %s1044
          %s1048 = smul.addr %s1047, 2
          %s1049 = scalar_lea.vmem %s3, %s1048
        $region48: #{flatten_head.1} parent=43 // pred_fallthru
          _
      $region44: #{flatten_head.1} parent=5 // pred_fallthru
        _
    $region6: #{flatten_head.1} parent=1 // loop_footer
      %s16 = sadd.s32 1, %s12
    $region7: #{flatten_head.1} parent=1 // loop_footer_branch
      %11 = sbr.rel target = $region3
    $region8: #{flatten_head.1} parent=1 // loop_exit
      _
    %1050 = vsyncpa [#allocation3], 1
    %s1051 = scalar_lea.sflag [#allocation3], 1
    %1052 = vsyncpa %s1051, 1

</llo_original>
